<compile_context>
chip_gen: v6e
topology: v6e:2x2x1
jax: 0.10.0
libtpu: 0.0.40
codegen_flags: <defaults>
</compile_context>

<pallas_src>
import jax
import jax.numpy as jnp
from jax.experimental import pallas as pl
from jax.experimental.pallas import tpu as pltpu


def _make_kernel(n_class, cin, hw_tile, num_tiles, use_vpu_contraction):
    """Build the kernel for static (NC, Cin, hw_tile, num_tiles) config."""

    def kernel(x_ref, w_ref, b_ref, o_ref, z_scr, cw_scr, m_scr):
        # x_ref : (1, Cin, hw_tile)   one HW tile of one batch element
        # w_ref : (2*NC, Cin)  fused [conv1; conv2] weights
        # b_ref : (2*NC, 1)    fused biases
        # o_ref : (1, NC, HW)  resident output block for this batch element
        # z_scr : (num_tiles, NC, hw_tile) f32   relu(conv1) tiles
        # cw_scr: (num_tiles, NC, hw_tile) f32   sigmoid(conv2) tiles
        # m_scr : (NC, 1) f32  running per-class max of z
        t = pl.program_id(1)

        x_t = x_ref[0].astype(jnp.float32)          # (Cin, hw_tile)
        w = w_ref[...].astype(jnp.float32)          # (2*NC, Cin)
        b = b_ref[...].astype(jnp.float32)          # (2*NC, 1)

        if use_vpu_contraction:
            # Tiny Cin: unrolled broadcast-FMAs on the VPU instead of a
            # mostly-padding f32 MXU pass.
            zc = w[:, 0:1] * x_t[0:1, :]
            for c in range(1, cin):
                zc = zc + w[:, c:c + 1] * x_t[c:c + 1, :]
            zc = zc + b
        else:
            zc = jnp.dot(w, x_t, preferred_element_type=jnp.float32) + b

        z = jnp.maximum(zc[:n_class, :], 0.0)       # relu(conv1)    (NC, hw_tile)
        cw = jax.nn.sigmoid(zc[n_class:, :])        # sigmoid(conv2) (NC, hw_tile)

        # Park tiles in VMEM scratch; the normalization needs the full-image
        # exp-sum, so it runs once on the last HW tile.
        z_scr[t] = z
        cw_scr[t] = cw

        @pl.when(t == 0)
        def _():
            m_scr[...] = jnp.full(m_scr.shape, -jnp.inf, dtype=m_scr.dtype)

        m_scr[...] = jnp.maximum(m_scr[...], jnp.max(z, axis=-1, keepdims=True))

        @pl.when(t == num_tiles - 1)
        def _():
            m = m_scr[...]                                        # (NC, 1)
            s = jnp.zeros((n_class, 1), jnp.float32)
            for i in range(num_tiles):                            # static unroll
                e_i = jnp.exp(z_scr[i] - m)                       # stable exp
                z_scr[i] = e_i                                    # reuse as e storage
                s = s + jnp.sum(e_i, axis=-1, keepdims=True)
            inv = pl.reciprocal(s, approx=True)                   # EUP vrcp, ~free
            for i in range(num_tiles):
                lo = i * hw_tile
                o_ref[0, :, lo:lo + hw_tile] = (
                    z_scr[i] * cw_scr[i] * inv).astype(o_ref.dtype)

    return kernel


def _pick_hw_tile(hw, max_tile=2048):
    """Largest divisor of hw <= max_tile, preferring lane-aligned (x128) tiles."""
    if hw <= max_tile:
        return hw
    fallback = None
    for t in range(max_tile, 0, -1):
        if hw % t == 0:
            if t % 128 == 0:
                return t
            if fallback is None:
                fallback = t
    return fallback or hw


def attention_block(x_nchw, w1, b1, w2, b2, *, hw_tile=None, contraction="auto"):
    """x_nchw: [B, Cin, H, W]; w1,w2: [NC, Cin]; b1,b2: [NC]. Returns [B, NC, H, W]."""
    B, Cin, H, W = x_nchw.shape
    NC = w1.shape[0]
    HW = H * W

    # NCHW-native: reshape only (no data movement).
    x_flat = x_nchw.reshape(B, Cin, HW)
    w_cat = jnp.concatenate([w1, w2], axis=0)                   # (2*NC, Cin)
    b_cat = jnp.concatenate([b1, b2], axis=0).reshape(2 * NC, 1)

    if hw_tile is None:
        hw_tile = _pick_hw_tile(HW)
    assert HW % hw_tile == 0, "hw_tile must divide H*W"
    num_tiles = HW // hw_tile

    if contraction == "auto":
        use_vpu = Cin <= 8
    else:
        use_vpu = contraction == "vpu"

    kernel = _make_kernel(NC, Cin, hw_tile, num_tiles, use_vpu)

    # VMEM budget: double-buffered x tile + resident output + f32 scratches
    # + weights. Raise above the 16 MiB v5e default, cap below v7x's 64 MiB.
    itemsize = x_flat.dtype.itemsize
    est = (2 * Cin * hw_tile * itemsize          # pipelined input tiles
           + NC * HW * itemsize                  # resident output block
           + 2 * NC * HW * 4                     # z / cw scratches (f32)
           + (2 * NC * Cin + 2 * NC + NC) * 4)   # weights, bias, max scratch
    vmem_limit = int(min(max(2 * est, 32 * 1024 * 1024), 48 * 1024 * 1024))

    out_flat = pl.pallas_call(
        kernel,
        out_shape=jax.ShapeDtypeStruct((B, NC, HW), x_flat.dtype),
        grid_spec=pltpu.PrefetchScalarGridSpec(
            num_scalar_prefetch=0,
            grid=(B, num_tiles),
            in_specs=[
                pl.BlockSpec((1, Cin, hw_tile), lambda b, t: (b, 0, t)),
                pl.BlockSpec((2 * NC, Cin), lambda b, t: (0, 0)),
                pl.BlockSpec((2 * NC, 1), lambda b, t: (0, 0)),
            ],
            out_specs=pl.BlockSpec((1, NC, HW), lambda b, t: (b, 0, 0)),
            scratch_shapes=[
                pltpu.VMEM((num_tiles, NC, hw_tile), jnp.float32),  # z tiles
                pltpu.VMEM((num_tiles, NC, hw_tile), jnp.float32),  # sigmoid tiles
                pltpu.VMEM((NC, 1), jnp.float32),                   # running max
            ],
        ),
        compiler_params=pltpu.CompilerParams(
            dimension_semantics=("parallel", "arbitrary"),
            vmem_limit_bytes=vmem_limit,
        ),
    )(x_flat, w_cat, b_cat)

    return out_flat.reshape(B, NC, H, W)


def attention_block_ref(x_nchw, w1, b1, w2, b2):
    """Pure-JAX reference matching the PyTorch forward (w*: [NC, Cin])."""
    z = jnp.einsum("bchw,nc->bnhw", x_nchw, w1) + b1[None, :, None, None]
    z = jax.nn.relu(z)
    e = jnp.exp(z)
    nz = e / e.sum(axis=(2, 3), keepdims=True)
    c = jnp.einsum("bchw,nc->bnhw", x_nchw, w2) + b2[None, :, None, None]
    return nz * jax.nn.sigmoid(c)


if __name__ == "__main__":
    B, Cin, H, W = 2, 4, 16, 16
    n_class = 4

    key = jax.random.PRNGKey(0)
    kx, kw1, kb1, kw2, kb2 = jax.random.split(key, 5)

    x = jax.random.normal(kx, (B, Cin, H, W), dtype=jnp.float32)
    # Conv2d(in_ch, n_class, 1) params in conv-native [NC, Cin] layout.
    w1 = jax.random.normal(kw1, (n_class, Cin), dtype=jnp.float32) * 0.5
    b1 = jax.random.normal(kb1, (n_class,), dtype=jnp.float32) * 0.1
    w2 = jax.random.normal(kw2, (n_class, Cin), dtype=jnp.float32) * 0.5
    b2 = jax.random.normal(kb2, (n_class,), dtype=jnp.float32) * 0.1

    ref = attention_block_ref(x, w1, b1, w2, b2)

    # 1) Default: single HW tile, VPU contraction (Cin=4 is tiny).
    out = jax.block_until_ready(attention_block(x, w1, b1, w2, b2))
    assert out.shape == (B, n_class, H, W)
    assert jnp.allclose(out, ref, atol=2e-4, rtol=3e-3), float(
        jnp.max(jnp.abs(out - ref)))

    # 2) Tiled-HW path (2 tiles): exercises the resident-output / deferred
    #    normalization used for large images on v7x.
    out2 = jax.block_until_ready(
        attention_block(x, w1, b1, w2, b2, hw_tile=128))
    assert jnp.allclose(out2, ref, atol=2e-4, rtol=3e-3), float(
        jnp.max(jnp.abs(out2 - ref)))

    # 3) MXU contraction path (used automatically for larger Cin).
    out3 = jax.block_until_ready(
        attention_block(x, w1, b1, w2, b2, contraction="mxu"))
    assert jnp.allclose(out3, ref, atol=2e-4, rtol=3e-3), float(
        jnp.max(jnp.abs(out3 - ref)))

    print("KERNEL_OK")
</pallas_src>

<mosaic_0001>
module attributes {stable_mosaic.version = 11 : i64} {
  func.func @kernel(%arg0: i32, %arg1: i32, %arg2: memref<1x4x256xf32, #tpu.memory_space<vmem>>, %arg3: memref<8x4xf32, #tpu.memory_space<vmem>>, %arg4: memref<8x1xf32, #tpu.memory_space<vmem>>, %arg5: memref<1x4x256xf32, #tpu.memory_space<vmem>>, %arg6: memref<1x4x256xf32, #tpu.memory_space<vmem>>, %arg7: memref<1x4x256xf32, #tpu.memory_space<vmem>>, %arg8: memref<4x1xf32, #tpu.memory_space<vmem>>) attributes {dimension_semantics = [#tpu.dimension_semantics<parallel>, #tpu.dimension_semantics<arbitrary>], iteration_bounds = array<i64: 2, 1>, scalar_prefetch = 0 : i64, scratch_operands = 3 : i64, tpu.core_type = #tpu.core_type<tc>, window_params = [{transform_indices = @transform_0, window_bounds = array<i64: 1, 4, 256>}, {pipeline_mode = #tpu.pipeline_mode<synchronous>, transform_indices = @transform_1, window_bounds = array<i64: 8, 4>}, {pipeline_mode = #tpu.pipeline_mode<synchronous>, transform_indices = @transform_2, window_bounds = array<i64: 8, 1>}, {transform_indices = @transform_3, window_bounds = array<i64: 1, 4, 256>}]} {
    %c0 = arith.constant 0 : index
    %c0_0 = arith.constant 0 : index
    %c0_1 = arith.constant 0 : index
    %0 = vector.load %arg2[%c0, %c0_0, %c0_1] : memref<1x4x256xf32, #tpu.memory_space<vmem>>, vector<1x4x256xf32>
    %1 = vector.shape_cast %0 : vector<1x4x256xf32> to vector<4x256xf32>
    %c0_2 = arith.constant 0 : index
    %c0_3 = arith.constant 0 : index
    %2 = vector.load %arg3[%c0_2, %c0_3] : memref<8x4xf32, #tpu.memory_space<vmem>>, vector<8x4xf32>
    %c0_4 = arith.constant 0 : index
    %c0_5 = arith.constant 0 : index
    %3 = vector.load %arg4[%c0_4, %c0_5] : memref<8x1xf32, #tpu.memory_space<vmem>>, vector<8x1xf32>
    %4 = vector.extract_strided_slice %2 {offsets = [0, 0], sizes = [8, 1], strides = [1, 1]} : vector<8x4xf32> to vector<8x1xf32>
    %5 = vector.extract_strided_slice %1 {offsets = [0, 0], sizes = [1, 256], strides = [1, 1]} : vector<4x256xf32> to vector<1x256xf32>
    %6 = vector.broadcast %4 : vector<8x1xf32> to vector<8x256xf32>
    %7 = vector.broadcast %5 : vector<1x256xf32> to vector<8x256xf32>
    %8 = arith.mulf %6, %7 : vector<8x256xf32>
    %9 = vector.extract_strided_slice %2 {offsets = [0, 1], sizes = [8, 1], strides = [1, 1]} : vector<8x4xf32> to vector<8x1xf32>
    %10 = vector.extract_strided_slice %1 {offsets = [1, 0], sizes = [1, 256], strides = [1, 1]} : vector<4x256xf32> to vector<1x256xf32>
    %11 = vector.broadcast %9 : vector<8x1xf32> to vector<8x256xf32>
    %12 = vector.broadcast %10 : vector<1x256xf32> to vector<8x256xf32>
    %13 = arith.mulf %11, %12 : vector<8x256xf32>
    %14 = arith.addf %8, %13 : vector<8x256xf32>
    %15 = vector.extract_strided_slice %2 {offsets = [0, 2], sizes = [8, 1], strides = [1, 1]} : vector<8x4xf32> to vector<8x1xf32>
    %16 = vector.extract_strided_slice %1 {offsets = [2, 0], sizes = [1, 256], strides = [1, 1]} : vector<4x256xf32> to vector<1x256xf32>
    %17 = vector.broadcast %15 : vector<8x1xf32> to vector<8x256xf32>
    %18 = vector.broadcast %16 : vector<1x256xf32> to vector<8x256xf32>
    %19 = arith.mulf %17, %18 : vector<8x256xf32>
    %20 = arith.addf %14, %19 : vector<8x256xf32>
    %21 = vector.extract_strided_slice %2 {offsets = [0, 3], sizes = [8, 1], strides = [1, 1]} : vector<8x4xf32> to vector<8x1xf32>
    %22 = vector.extract_strided_slice %1 {offsets = [3, 0], sizes = [1, 256], strides = [1, 1]} : vector<4x256xf32> to vector<1x256xf32>
    %23 = vector.broadcast %21 : vector<8x1xf32> to vector<8x256xf32>
    %24 = vector.broadcast %22 : vector<1x256xf32> to vector<8x256xf32>
    %25 = arith.mulf %23, %24 : vector<8x256xf32>
    %26 = arith.addf %20, %25 : vector<8x256xf32>
    %27 = vector.broadcast %3 : vector<8x1xf32> to vector<8x256xf32>
    %28 = arith.addf %26, %27 : vector<8x256xf32>
    %29 = vector.extract_strided_slice %28 {offsets = [0, 0], sizes = [4, 256], strides = [1, 1]} : vector<8x256xf32> to vector<4x256xf32>
    %cst = arith.constant 0.000000e+00 : f32
    %30 = vector.broadcast %cst : f32 to vector<4x256xf32>
    %31 = arith.maximumf %29, %30 : vector<4x256xf32>
    %32 = vector.extract_strided_slice %28 {offsets = [4, 0], sizes = [4, 256], strides = [1, 1]} : vector<8x256xf32> to vector<4x256xf32>
    %33 = arith.negf %32 : vector<4x256xf32>
    %34 = math.exp %33 : vector<4x256xf32>
    %cst_6 = arith.constant 1.000000e+00 : f32
    %35 = vector.broadcast %cst_6 : f32 to vector<4x256xf32>
    %36 = arith.addf %35, %34 : vector<4x256xf32>
    %37 = arith.divf %35, %36 : vector<4x256xf32>
    %38 = arith.index_cast %arg1 : i32 to index
    %c0_7 = arith.constant 0 : index
    %c0_8 = arith.constant 0 : index
    %39 = vector.load %arg6[%38, %c0_7, %c0_8] : memref<1x4x256xf32, #tpu.memory_space<vmem>>, vector<1x4x256xf32>
    %40 = vector.shape_cast %39 : vector<1x4x256xf32> to vector<4x256xf32>
    %41 = vector.shape_cast %31 : vector<4x256xf32> to vector<1x4x256xf32>
    tpu.vector_store %arg6[%38, %c0_7, %c0_8], %41 {strides = array<i32>} : memref<1x4x256xf32, #tpu.memory_space<vmem>>, vector<1x4x256xf32>,
    %42 = arith.index_cast %arg1 : i32 to index
    %c0_9 = arith.constant 0 : index
    %c0_10 = arith.constant 0 : index
    %43 = vector.load %arg7[%42, %c0_9, %c0_10] : memref<1x4x256xf32, #tpu.memory_space<vmem>>, vector<1x4x256xf32>
    %44 = vector.shape_cast %43 : vector<1x4x256xf32> to vector<4x256xf32>
    %45 = vector.shape_cast %37 : vector<4x256xf32> to vector<1x4x256xf32>
    tpu.vector_store %arg7[%42, %c0_9, %c0_10], %45 {strides = array<i32>} : memref<1x4x256xf32, #tpu.memory_space<vmem>>, vector<1x4x256xf32>,
    %c0_i32 = arith.constant 0 : i32
    %46 = arith.cmpi eq, %arg1, %c0_i32 : i32
    %47 = arith.extui %46 : i1 to i32
    %c0_i32_11 = arith.constant 0 : i32
    %48 = arith.cmpi ne, %47, %c0_i32_11 : i32
    scf.if %48 {
      %cst_19 = arith.constant 0xFF800000 : f32
      %57 = vector.broadcast %cst_19 : f32 to vector<4x1xf32>
      %c0_20 = arith.constant 0 : index
      %c0_21 = arith.constant 0 : index
      %58 = vector.load %arg8[%c0_20, %c0_21] : memref<4x1xf32, #tpu.memory_space<vmem>>, vector<4x1xf32>
      tpu.vector_store %arg8[%c0_20, %c0_21], %57 {strides = array<i32>} : memref<4x1xf32, #tpu.memory_space<vmem>>, vector<4x1xf32>,
    } else {
    }
    %c0_12 = arith.constant 0 : index
    %c0_13 = arith.constant 0 : index
    %49 = vector.load %arg8[%c0_12, %c0_13] : memref<4x1xf32, #tpu.memory_space<vmem>>, vector<4x1xf32>
    %cst_14 = arith.constant dense<0xFF800000> : vector<4xf32>
    %50 = vector.multi_reduction <maximumf>, %31, %cst_14 [1] : vector<4x256xf32> to vector<4xf32>
    %51 = vector.shape_cast %50 : vector<4xf32> to vector<4x1xf32>
    %52 = arith.maximumf %49, %51 : vector<4x1xf32>
    %c0_15 = arith.constant 0 : index
    %c0_16 = arith.constant 0 : index
    %53 = vector.load %arg8[%c0_15, %c0_16] : memref<4x1xf32, #tpu.memory_space<vmem>>, vector<4x1xf32>
    tpu.vector_store %arg8[%c0_15, %c0_16], %52 {strides = array<i32>} : memref<4x1xf32, #tpu.memory_space<vmem>>, vector<4x1xf32>,
    %c0_i32_17 = arith.constant 0 : i32
    %54 = arith.cmpi eq, %arg1, %c0_i32_17 : i32
    %55 = arith.extui %54 : i1 to i32
    %c0_i32_18 = arith.constant 0 : i32
    %56 = arith.cmpi ne, %55, %c0_i32_18 : i32
    scf.if %56 {
      %c0_19 = arith.constant 0 : index
      %c0_20 = arith.constant 0 : index
      %57 = vector.load %arg8[%c0_19, %c0_20] : memref<4x1xf32, #tpu.memory_space<vmem>>, vector<4x1xf32>
      %cst_21 = arith.constant 0.000000e+00 : f32
      %58 = vector.broadcast %cst_21 : f32 to vector<4x1xf32>
      %c0_22 = arith.constant 0 : index
      %c0_23 = arith.constant 0 : index
      %c0_24 = arith.constant 0 : index
      %59 = vector.load %arg6[%c0_22, %c0_23, %c0_24] : memref<1x4x256xf32, #tpu.memory_space<vmem>>, vector<1x4x256xf32>
      %60 = vector.shape_cast %59 : vector<1x4x256xf32> to vector<4x256xf32>
      %61 = vector.broadcast %57 : vector<4x1xf32> to vector<4x256xf32>
      %62 = arith.subf %60, %61 : vector<4x256xf32>
      %63 = math.exp %62 : vector<4x256xf32>
      %c0_25 = arith.constant 0 : index
      %c0_26 = arith.constant 0 : index
      %c0_27 = arith.constant 0 : index
      %64 = vector.load %arg6[%c0_25, %c0_26, %c0_27] : memref<1x4x256xf32, #tpu.memory_space<vmem>>, vector<1x4x256xf32>
      %65 = vector.shape_cast %64 : vector<1x4x256xf32> to vector<4x256xf32>
      %66 = vector.shape_cast %63 : vector<4x256xf32> to vector<1x4x256xf32>
      tpu.vector_store %arg6[%c0_25, %c0_26, %c0_27], %66 {strides = array<i32>} : memref<1x4x256xf32, #tpu.memory_space<vmem>>, vector<1x4x256xf32>,
      %cst_28 = arith.constant dense<0.000000e+00> : vector<4xf32>
      %67 = vector.multi_reduction <add>, %63, %cst_28 [1] : vector<4x256xf32> to vector<4xf32>
      %68 = vector.shape_cast %67 : vector<4xf32> to vector<4x1xf32>
      %69 = arith.addf %58, %68 : vector<4x1xf32>
      %70 = tpu.reciprocal %69 {approx = true} : vector<4x1xf32> -> vector<4x1xf32>
      %c0_29 = arith.constant 0 : index
      %c0_30 = arith.constant 0 : index
      %c0_31 = arith.constant 0 : index
      %71 = vector.load %arg6[%c0_29, %c0_30, %c0_31] : memref<1x4x256xf32, #tpu.memory_space<vmem>>, vector<1x4x256xf32>
      %72 = vector.shape_cast %71 : vector<1x4x256xf32> to vector<4x256xf32>
      %c0_32 = arith.constant 0 : index
      %c0_33 = arith.constant 0 : index
      %c0_34 = arith.constant 0 : index
      %73 = vector.load %arg7[%c0_32, %c0_33, %c0_34] : memref<1x4x256xf32, #tpu.memory_space<vmem>>, vector<1x4x256xf32>
      %74 = vector.shape_cast %73 : vector<1x4x256xf32> to vector<4x256xf32>
      %75 = arith.mulf %72, %74 : vector<4x256xf32>
      %76 = vector.broadcast %70 : vector<4x1xf32> to vector<4x256xf32>
      %77 = arith.mulf %75, %76 : vector<4x256xf32>
      %c0_35 = arith.constant 0 : index
      %c0_36 = arith.constant 0 : index
      %c0_37 = arith.constant 0 : index
      %78 = vector.load %arg5[%c0_35, %c0_36, %c0_37] : memref<1x4x256xf32, #tpu.memory_space<vmem>>, vector<1x4x256xf32>
      %79 = vector.shape_cast %78 : vector<1x4x256xf32> to vector<4x256xf32>
      %80 = vector.shape_cast %77 : vector<4x256xf32> to vector<1x4x256xf32>
      tpu.vector_store %arg5[%c0_35, %c0_36, %c0_37], %80 {strides = array<i32>} : memref<1x4x256xf32, #tpu.memory_space<vmem>>, vector<1x4x256xf32>,
    } else {
    }
    return
  }
  func.func @transform_0(%arg0: i32, %arg1: i32) -> (i32, i32, i32) {
    %c0_i32 = arith.constant 0 : i32
    %c0_i32_0 = arith.constant 0 : i32
    return %arg0, %c0_i32, %arg1 : i32, i32, i32
  }
  func.func @transform_1(%arg0: i32, %arg1: i32) -> (i32, i32) {
    %c0_i32 = arith.constant 0 : i32
    %c0_i32_0 = arith.constant 0 : i32
    %c0_i32_1 = arith.constant 0 : i32
    return %c0_i32, %c0_i32_0 : i32, i32
  }
  func.func @transform_2(%arg0: i32, %arg1: i32) -> (i32, i32) {
    %c0_i32 = arith.constant 0 : i32
    %c0_i32_0 = arith.constant 0 : i32
    %c0_i32_1 = arith.constant 0 : i32
    return %c0_i32, %c0_i32_0 : i32, i32
  }
  func.func @transform_3(%arg0: i32, %arg1: i32) -> (i32, i32, i32) {
    %c0_i32 = arith.constant 0 : i32
    %c0_i32_0 = arith.constant 0 : i32
    %c0_i32_1 = arith.constant 0 : i32
    return %arg0, %c0_i32, %c0_i32_0 : i32, i32, i32
  }
}

</mosaic_0001>

<llo_original>
// kernel: tpu_custom_call.1
$region0: #{tpu_custom_call.1}
  #allocation0 [shape = 'u32[]', space=smem, size = 0x4, offset = 0x4, fixed_abs, tag = 'smem constant byte address 0x4 - core index']
  #allocation1 [shape = 'u32[144,128]{1,0:T(1,128)}', space=vmem, size = 0x12000, scoped, tag = 'internal scratch']
  #allocation2 [shape = 'f32[1,4,256]{2,1,0:T(4,128)}', space=vmem, size = 0x1000, scoped, tag = 'scratch operand']
  #allocation3 [shape = 'f32[1,4,256]{2,1,0:T(4,128)}', space=vmem, size = 0x1000, scoped, tag = 'scratch operand']
  #allocation4 [shape = 'f32[4,1]{1,0:T(4,128)}', space=vmem, size = 0x800, scoped, tag = 'scratch operand']
  %s0 = inlined_call_operand.vmem [shape: f32[2,4,256], index: 0, kind: input, shape index: {}]
  %s1 = inlined_call_operand.vmem [shape: f32[8,4], index: 1, kind: input, shape index: {}]
  %s2 = inlined_call_operand.vmem [shape: f32[8,1], index: 2, kind: input, shape index: {}]
  %s3 = inlined_call_operand.hbm [shape: f32[2,4,256], index: 3, kind: output, shape index: {}]
  %s4 = sld [smem:[#allocation0]]
  $region53: #{tpu_custom_call.1} parent=0
    _
  %s6 = ssub.s32 1, %s4
  %s7 = scalar_select 0, %s6, %s4
  $region1: #{tpu_custom_call.1} parent=0
    #allocation5 [shape = 'u8[8192]{0}', space=vmem, size = 0x2000, scoped, tag = 'output window, operand 0']
    #allocation6 [shape = 's32[2]{0}', space=sflag, size = 0x8, scoped, tag = 'scoped memory for tpu_custom_call.1']
    %8 = vsyncpa [#allocation6], 0
    %s9 = scalar_lea.sflag [#allocation6], 1
    %10 = vsyncpa %s9, 0
    loop: start=0, step=1, limit=4
    $region2: #{tpu_custom_call.1} parent=1 // loop_pre_header
      _
    $region3: #{tpu_custom_call.1} parent=1 // loop_header
      %s12 = sphi 0, %s16
      %p13 = scmp.ge.s32.totalorder %s12, 4
      %s19 = sphi 0, %s31
      %s20 = sphi 0, %s27
      %s21 = sphi 0, %s19
      %s22 = sphi 0, %s20
      %s23 = sphi 0, %s21
      %s24 = sphi 0, %s22
      %s36 = sphi 0, %s38
      %s39 = sphi 0, %s36
      %s40 = sphi 0, %s39
      %s56 = sphi 0, %s40
      %s60 = sphi 0, %s60
      %s62 = sphi 0, %s60
      %s63 = sphi 0, %s62
      %s77 = sphi 0, %s63
      %s81 = sphi 0, %s81
      %s83 = sphi 0, %s81
      %s84 = sphi 0, %s83
      %s98 = sphi 0, %s84
      %s104 = sphi 0, %s106
      %s107 = sphi 0, %s104
      %s108 = sphi 0, %s107
      %s124 = sphi 0, %s108
    $region4: #{tpu_custom_call.1} parent=1 // loop_header_branch
      %15 = sbr.rel (%p13) target = $region8
    $region5: #{tpu_custom_call.1} parent=1 // loop_body
      %s17 = ssub.s32 %s12, 1
      %s18 = ssub.s32 %s12, 2
      %s25 = sadd.s32 1, %s20
      %p26 = scmp.ge.s32.totalorder %s25, 1
      %s27 = scalar_select %p26, 0, %s25
      %s28 = sadd.s32 1, %s19
      %s29 = scalar_select %p26, %s28, %s19
      %p30 = scmp.ge.s32.totalorder %s29, 2
      %s31 = scalar_select %p30, 0, %s29
      %s32 = ssub.s32 %s19, %s31
      %s33 = ssub.s32 %s20, %s27
      %s34 = sor.u32 %s32, %s33
      %p35 = scmp.eq.s32.totalorder %s34, 0
      %s37 = sadd.s32 %s36, 1
      %s38 = scalar_select %p35, %s36, %s37
      %p41 = pneg %p35
      %p42 = scmp.eq.s32.totalorder %s12, 1
      %p43 = por %p41, %p42
      %p44 = scmp.ne.s32.totalorder %s36, %s39
      %p45 = scmp.eq.s32.totalorder %s12, 0
      %p46 = por %p44, %p45
      %p47 = scmp.ne.s32.totalorder %s36, %s39
      %p48 = scmp.eq.s32.totalorder %s17, 1
      %p49 = por %p47, %p48
      %p50 = scmp.ne.s32.totalorder %s39, %s40
      %p51 = scmp.eq.s32.totalorder %s17, 0
      %p52 = por %p50, %p51
      %p53 = scmp.ne.s32.totalorder %s39, %s40
      %p54 = scmp.eq.s32.totalorder %s18, 1
      %p55 = por %p53, %p54
      %p57 = scmp.ne.s32.totalorder %s40, %s56
      %p58 = scmp.eq.s32.totalorder %s18, 0
      %p59 = por %p57, %p58
      %s61 = sadd.s32 %s60, 1
      %p64 = scmp.eq.s32.totalorder %s12, 1
      %p65 = scmp.ne.s32.totalorder %s60, %s62
      %p66 = scmp.eq.s32.totalorder %s12, 0
      %p67 = por %p65, %p66
      %p68 = scmp.ne.s32.totalorder %s60, %s62
      %p69 = scmp.eq.s32.totalorder %s17, 1
      %p70 = por %p68, %p69
      %p71 = scmp.ne.s32.totalorder %s62, %s63
      %p72 = scmp.eq.s32.totalorder %s17, 0
      %p73 = por %p71, %p72
      %p74 = scmp.ne.s32.totalorder %s62, %s63
      %p75 = scmp.eq.s32.totalorder %s18, 1
      %p76 = por %p74, %p75
      %p78 = scmp.ne.s32.totalorder %s63, %s77
      %p79 = scmp.eq.s32.totalorder %s18, 0
      %p80 = por %p78, %p79
      %s82 = sadd.s32 %s81, 1
      %p85 = scmp.eq.s32.totalorder %s12, 1
      %p86 = scmp.ne.s32.totalorder %s81, %s83
      %p87 = scmp.eq.s32.totalorder %s12, 0
      %p88 = por %p86, %p87
      %p89 = scmp.ne.s32.totalorder %s81, %s83
      %p90 = scmp.eq.s32.totalorder %s17, 1
      %p91 = por %p89, %p90
      %p92 = scmp.ne.s32.totalorder %s83, %s84
      %p93 = scmp.eq.s32.totalorder %s17, 0
      %p94 = por %p92, %p93
      %p95 = scmp.ne.s32.totalorder %s83, %s84
      %p96 = scmp.eq.s32.totalorder %s18, 1
      %p97 = por %p95, %p96
      %p99 = scmp.ne.s32.totalorder %s84, %s98
      %p100 = scmp.eq.s32.totalorder %s18, 0
      %p101 = por %p99, %p100
      %s102 = ssub.s32 %s19, %s31
      %p103 = scmp.eq.s32.totalorder %s102, 0
      %s105 = sadd.s32 %s104, 1
      %s106 = scalar_select %p103, %s104, %s105
      %p109 = pneg %p103
      %p110 = scmp.eq.s32.totalorder %s12, 1
      %p111 = por %p109, %p110
      %p112 = scmp.ne.s32.totalorder %s104, %s107
      %p113 = scmp.eq.s32.totalorder %s12, 0
      %p114 = por %p112, %p113
      %p115 = scmp.ne.s32.totalorder %s104, %s107
      %p116 = scmp.eq.s32.totalorder %s17, 1
      %p117 = por %p115, %p116
      %p118 = scmp.ne.s32.totalorder %s107, %s108
      %p119 = scmp.eq.s32.totalorder %s17, 0
      %p120 = por %p118, %p119
      %p121 = scmp.ne.s32.totalorder %s107, %s108
      %p122 = scmp.eq.s32.totalorder %s18, 1
      %p123 = por %p121, %p122
      %p125 = scmp.ne.s32.totalorder %s108, %s124
      %p126 = scmp.eq.s32.totalorder %s18, 0
      %p127 = por %p125, %p126
      %p128 = scmp.le.s32.totalorder 1, %s12
      %p129 = scmp.lt.s32.totalorder %s12, 3
      %p130 = pnand %p128, %p129
      %p131 = pneg %p130
      // Predicated region
      $region9: #{tpu_custom_call.1} parent=5 // pred_check
        _
      $region10: #{tpu_custom_call.1} parent=5 // pred_check_branch
        %133 = sbr.rel (%p130) target = $region12
      $region11: #{tpu_custom_call.1} parent=5 // pred_region
        %s134 = ssub.s32 %s12, 1
        // Predicated region
        $region13: #{tpu_custom_call.1} parent=11 // pred_check
          %p135 = pneg %p73
        $region14: #{tpu_custom_call.1} parent=11 // pred_check_branch
          %137 = sbr.rel (%p135) target = $region16
        $region15: #{tpu_custom_call.1} parent=11 // pred_region
          _
        $region16: #{tpu_custom_call.1} parent=11 // pred_fallthru
          _
        // Predicated region
        $region17: #{tpu_custom_call.1} parent=11 // pred_check
          %p138 = pneg %p94
        $region18: #{tpu_custom_call.1} parent=11 // pred_check_branch
          %140 = sbr.rel (%p138) target = $region20
        $region19: #{tpu_custom_call.1} parent=11 // pred_region
          _
        $region20: #{tpu_custom_call.1} parent=11 // pred_fallthru
          _
      $region12: #{tpu_custom_call.1} parent=5 // pred_fallthru
        _
      %p141 = scmp.lt.s32.totalorder %s12, 2
      // Predicated region
      $region21: #{tpu_custom_call.1} parent=5 // pred_check
        %p142 = pneg %p141
      $region22: #{tpu_custom_call.1} parent=5 // pred_check_branch
        %144 = sbr.rel (%p142) target = $region24
      $region23: #{tpu_custom_call.1} parent=5 // pred_region
        // Predicated region
        $region25: #{tpu_custom_call.1} parent=23 // pred_check
          %p145 = pneg %p46
        $region26: #{tpu_custom_call.1} parent=23 // pred_check_branch
          %147 = sbr.rel (%p145) target = $region28
        $region27: #{tpu_custom_call.1} parent=23 // pred_region
          %s148 = smul.u32 2, %s20
          %p149 = scmp.lt.s32.totalorder %s19, 1
          %s150 = scalar_select %p149, %s19, 1
          %p151 = scmp.lt.s32.totalorder %s148, 1
          %s152 = scalar_select %p151, %s148, 1
          %s153 = smul.addr %s150, 2
          %s154 = sadd.s32 %s152, %s153
          %s155 = smul.addr %s154, 4
          %s156 = scalar_lea.vmem %s0, %s155
          %s157 = smul.u32 2, %s20
        $region28: #{tpu_custom_call.1} parent=23 // pred_fallthru
          _
      $region24: #{tpu_custom_call.1} parent=5 // pred_fallthru
        _
      %p158 = scmp.le.s32.totalorder 1, %s12
      %p159 = scmp.lt.s32.totalorder %s12, 3
      %p160 = pnand %p158, %p159
      %p161 = pneg %p160
      // Predicated region
      $region29: #{tpu_custom_call.1} parent=5 // pred_check
        _
      $region30: #{tpu_custom_call.1} parent=5 // pred_check_branch
        %163 = sbr.rel (%p160) target = $region32
      $region31: #{tpu_custom_call.1} parent=5 // pred_region
        %s164 = ssub.s32 %s12, 1
        %s165 = smul.u32 2, %s22
        %p166 = scmp.lt.s32.totalorder %s21, 1
        %s167 = scalar_select %p166, %s21, 1
        %p168 = scmp.lt.s32.totalorder %s165, 1
        %s169 = scalar_select %p168, %s165, 1
        %s170 = smul.addr %s167, 2
        %s171 = sadd.s32 %s169, %s170
        %s172 = smul.addr %s171, 4
        %s173 = scalar_lea.vmem %s0, %s172
        %p174 = pneg %p52
        %p175 = pneg %p49
        %p176 = pneg %p73
        %p177 = pneg %p70
        %p178 = pneg %p94
        %p179 = pneg %p91
        %p180 = pneg %p120
        %p181 = pneg %p117
        %s182 = sand.u32 %s107, 1
        %s183 = scalar_lea.sflag [#allocation6], %s182
        %s184 = sand.u32 %s107, 1
        %s185 = smul.addr %s184, 8
        %s186 = scalar_lea.vmem [#allocation5], %s185
        %s187 = smul.u32 2, %s22
        %p188 = scmp.lt.s32.totalorder %s21, 1
        %s189 = scalar_select %p188, %s21, 1
        %p190 = scmp.lt.s32.totalorder %s187, 1
        %s191 = scalar_select %p190, %s187, 1
        %s192 = smul.addr %s189, 2
        %s193 = sadd.s32 %s191, %s192
        %s194 = smul.addr %s193, 4
        %s195 = scalar_lea.vmem %s0, %s194
        %s196 = smul.u32 2, %s22
        %v197 = vld [vmem:[%s195] sm:$0xff]
        %v198 = vld [vmem:[%s1] sm:$0xff]
        %v199 = vld [vmem:[%s2] sm:$0xff]
        %201 = vset.pattern.permute.xlu0 0
        %202 = vperm.xlu0 %201, %v198
        %v203 = vpop.permute.xlu0 %202
        %v206 = vlaneseq
        %v207 = vshrl.u32 %v206, 7
        %v208 = vsub.s32 0, %v207
        %v209 = vrot.slane %v197, %v208
        %v210 = vlaneseq
        %v211 = vshrl.u32 %v210, 7
        %v212 = vsub.s32 4, %v211
        %v213 = vrot.slane %v197, %v212
        %v216 = vlaneseq
        %v217 = vshrl.u32 %v216, 7
        %v218 = vsub.s32 0, %v217
        %v219 = vrot.slane %v209, %v218
        %v220 = vlaneseq
        %v221 = vshrl.u32 %v220, 7
        %v222 = vsub.s32 0, %v221
        %v223 = vrot.slane %v213, %v222
        %v224 = vmul.f32 %v203, %v219
        %v225 = vmul.f32 %v203, %v223
        %226 = vset.pattern.permute.xlu0 1
        %227 = vperm.xlu0 %226, %v198
        %v228 = vpop.permute.xlu0 %227
        %v230 = vlaneseq
        %v231 = vshrl.u32 %v230, 7
        %v232 = vsub.s32 1, %v231
        %v233 = vrot.slane %v197, %v232
        %v234 = vlaneseq
        %v235 = vshrl.u32 %v234, 7
        %v236 = vsub.s32 5, %v235
        %v237 = vrot.slane %v197, %v236
        %v240 = vlaneseq
        %v241 = vshrl.u32 %v240, 7
        %v242 = vsub.s32 1, %v241
        %v243 = vrot.slane %v233, %v242
        %v244 = vlaneseq
        %v245 = vshrl.u32 %v244, 7
        %v246 = vsub.s32 1, %v245
        %v247 = vrot.slane %v237, %v246
        %v248 = vmul.f32 %v228, %v243
        %v249 = vmul.f32 %v228, %v247
        %v250 = vadd.f32 %v224, %v248
        %v251 = vadd.f32 %v225, %v249
        %252 = vset.pattern.permute.xlu0 2
        %253 = vperm.xlu0 %252, %v198
        %v254 = vpop.permute.xlu0 %253
        %v256 = vlaneseq
        %v257 = vshrl.u32 %v256, 7
        %v258 = vsub.s32 2, %v257
        %v259 = vrot.slane %v197, %v258
        %v260 = vlaneseq
        %v261 = vshrl.u32 %v260, 7
        %v262 = vsub.s32 6, %v261
        %v263 = vrot.slane %v197, %v262
        %v266 = vlaneseq
        %v267 = vshrl.u32 %v266, 7
        %v268 = vsub.s32 2, %v267
        %v269 = vrot.slane %v259, %v268
        %v270 = vlaneseq
        %v271 = vshrl.u32 %v270, 7
        %v272 = vsub.s32 2, %v271
        %v273 = vrot.slane %v263, %v272
        %v274 = vmul.f32 %v254, %v269
        %v275 = vmul.f32 %v254, %v273
        %v276 = vadd.f32 %v250, %v274
        %v277 = vadd.f32 %v251, %v275
        %278 = vset.pattern.permute.xlu0 3
        %279 = vperm.xlu0 %278, %v198
        %v280 = vpop.permute.xlu0 %279
        %v282 = vlaneseq
        %v283 = vshrl.u32 %v282, 7
        %v284 = vsub.s32 3, %v283
        %v285 = vrot.slane %v197, %v284
        %v286 = vlaneseq
        %v287 = vshrl.u32 %v286, 7
        %v288 = vsub.s32 7, %v287
        %v289 = vrot.slane %v197, %v288
        %v292 = vlaneseq
        %v293 = vshrl.u32 %v292, 7
        %v294 = vsub.s32 3, %v293
        %v295 = vrot.slane %v285, %v294
        %v296 = vlaneseq
        %v297 = vshrl.u32 %v296, 7
        %v298 = vsub.s32 3, %v297
        %v299 = vrot.slane %v289, %v298
        %v300 = vmul.f32 %v280, %v295
        %v301 = vmul.f32 %v280, %v299
        %v302 = vadd.f32 %v276, %v300
        %v303 = vadd.f32 %v277, %v301
        %305 = vset.pattern.permute.xlu0 0
        %306 = vperm.xlu0 %305, %v199
        %v307 = vpop.permute.xlu0 %306
        %v309 = vadd.f32 %v302, %v307
        %v310 = vadd.f32 %v303, %v307
        %v311 = vmax.f32 %v309, 0.0
        %v312 = vmax.f32 %v310, 0.0
        %v313 = vxor.u32 %v309, 2147483648
        %v314 = vxor.u32 %v310, 2147483648
        %v315 = vmul.f32 %v313, 1.442695
        %v316 = vpow.pop %v315
        %v317 = vmul.f32 %v314, 1.442695
        %v318 = vpow.pop %v317
        %v319 = vadd.f32 %v316, 1.0
        %v320 = vadd.f32 %v318, 1.0
        %v321 = vrcp.pop %v319
        %v322 = vmul.f32 1.0, %v321
        %v323 = vrcp.pop %v320
        %v324 = vmul.f32 1.0, %v323
        %v327 = vcombine.low %v311, %v312
        %s329 = smul.u32 %s22, 2
        %s330 = smul.addr %s329, 4
        %s331 = scalar_lea.vmem [#allocation2], %s330
        %332 = vst [vmem:[%s331] sm:$0xff] %v327
        %v335 = vcombine.high %v322, %v324
        %s337 = smul.addr %s329, 4
        %s338 = scalar_lea.vmem [#allocation3], %s337
        %339 = vst [vmem:[%s338] sm:$0xff] %v335
        %p340 = scmp.eq.s32.totalorder %s22, 0
        // Predicated region
        $region33: #{tpu_custom_call.1} parent=31 // pred_check
          %p341 = pneg %p340
        $region34: #{tpu_custom_call.1} parent=31 // pred_check_branch
          %343 = sbr.rel (%p341) target = $region36
        $region35: #{tpu_custom_call.1} parent=31 // pred_region
          %vm344 = vcmask 3072
          %345 = vst.msk [vmem:[#allocation4] sm:$0xf] %vm344, -inf
        $region36: #{tpu_custom_call.1} parent=31 // pred_fallthru
          _
        %v346 = vld [vmem:[#allocation4] sm:$0xf]
        %vm347 = vcmask 1043456
        %v348 = vsel %vm347, %v311, -inf
        %v349 = vsel %vm347, %v312, -inf
        %v350 = vmax.f32 %v348, %v349
        %351 = vmax.xlane.f32.xlu0 %v350
        %v352 = vpop.xlane.xlu0 %351
        %v353 = vmax.f32 %v346, %v352
        %vm354 = vcmask 3072
        %355 = vst.msk [vmem:[#allocation4] sm:$0xf] %vm354, %v353
        // Predicated region
        $region37: #{tpu_custom_call.1} parent=31 // pred_check
          %p356 = pneg %p340
        $region38: #{tpu_custom_call.1} parent=31 // pred_check_branch
          %358 = sbr.rel (%p356) target = $region40
        $region39: #{tpu_custom_call.1} parent=31 // pred_region
          %v359 = vld [vmem:[#allocation4] sm:$0xf]
          %v360 = vld [vmem:[#allocation2] sm:$0xff]
          %362 = vset.pattern.permute.xlu0 0
          %363 = vperm.xlu0 %362, %v359
          %v364 = vpop.permute.xlu0 %363
          %v366 = vunpack.c.l.s4 839922192
          %v367 = vunpack.c.0.s8 %v366
          %v368 = vlaneseq
          %v369 = vshrl.u32 %v368, 7
          %v370 = vsub.s32 %v367, %v369
          %v371 = vrot.slane %v364, %v370
          %v373 = vsub.f32 %v360, %v371
          %v374 = vmul.f32 %v373, 1.442695
          %v375 = vpow.pop %v374
          %376 = vst [vmem:[#allocation2] sm:$0xff] %v375
          %v378 = vcombine.high %v375, %v375
          %v380 = vsel %vm347, %v375, 0.0
          %v381 = vsel %vm347, %v378, 0.0
          %v382 = vadd.f32 %v380, %v381
          %383 = vadd.xlane.f32.xlu0 %v382
          %v384 = vpop.xlane.xlu0 %383
          %v385 = vadd.f32 %v384, 0.0
          %v386 = vrcp.pop %v385
          %v387 = vld [vmem:[#allocation2] sm:$0xff]
          %v388 = vld [vmem:[#allocation3] sm:$0xff]
          %v389 = vmul.f32 %v387, %v388
          %v392 = vunpack.c.l.s4 839922192
          %v393 = vunpack.c.0.s8 %v392
          %v394 = vlaneseq
          %v395 = vshrl.u32 %v394, 7
          %v396 = vsub.s32 %v393, %v395
          %v397 = vrot.slane %v386, %v396
          %v399 = vmul.f32 %v389, %v397
          %400 = vst [vmem:[%s186] sm:$0xff] %v399
        $region40: #{tpu_custom_call.1} parent=31 // pred_fallthru
          _
        %s401 = sand.u32 %s107, 1
        %s402 = scalar_lea.sflag [#allocation6], %s401
        %s403 = sand.u32 %s107, 1
        %s404 = smul.addr %s403, 8
        %s405 = scalar_lea.vmem [#allocation5], %s404
        // Predicated region
        $region41: #{tpu_custom_call.1} parent=31 // pred_check
          %p406 = pneg %p117
        $region42: #{tpu_custom_call.1} parent=31 // pred_check_branch
          %408 = sbr.rel (%p406) target = $region44
        $region43: #{tpu_custom_call.1} parent=31 // pred_region
          %s410 = ssub.s32 128, 128
          %411 = vsyncadd %s402, %s410
          %s412 = smul.addr %s21, 2
          %s413 = smul.addr %s412, 64
          %s414 = scalar_lea.hbm %s3, %s413
          %s416 = sshll.u32 %s405, 4
          %s417 = int_to_ptr.vmem [resolvable:$true] %s416
          %419 = dma.vmem_to_hbm [thread:$0]  %s417, 128, %s414, %s402
        $region44: #{tpu_custom_call.1} parent=31 // pred_fallthru
          _
      $region32: #{tpu_custom_call.1} parent=5 // pred_fallthru
        _
      %p420 = scmp.le.s32.totalorder 2, %s12
      // Predicated region
      $region45: #{tpu_custom_call.1} parent=5 // pred_check
        %p421 = pneg %p420
      $region46: #{tpu_custom_call.1} parent=5 // pred_check_branch
        %423 = sbr.rel (%p421) target = $region48
      $region47: #{tpu_custom_call.1} parent=5 // pred_region
        %s424 = ssub.s32 %s12, 2
        // Predicated region
        $region49: #{tpu_custom_call.1} parent=47 // pred_check
          %p425 = pneg %p123
        $region50: #{tpu_custom_call.1} parent=47 // pred_check_branch
          %427 = sbr.rel (%p425) target = $region52
        $region51: #{tpu_custom_call.1} parent=47 // pred_region
          %s428 = sand.u32 %s108, 1
          %s429 = scalar_lea.sflag [#allocation6], %s428
          %s430 = sand.u32 %s108, 1
          %s431 = smul.addr %s430, 8
          %s432 = scalar_lea.vmem [#allocation5], %s431
          %433 = dma.done %s429, 128
        $region52: #{tpu_custom_call.1} parent=47 // pred_fallthru
          _
      $region48: #{tpu_custom_call.1} parent=5 // pred_fallthru
        _
    $region6: #{tpu_custom_call.1} parent=1 // loop_footer
      %s16 = sadd.s32 1, %s12
    $region7: #{tpu_custom_call.1} parent=1 // loop_footer_branch
      %11 = sbr.rel target = $region3
    $region8: #{tpu_custom_call.1} parent=1 // loop_exit
      _
    %434 = vsyncpa [#allocation6], 1
    %s435 = scalar_lea.sflag [#allocation6], 1
    %436 = vsyncpa %s435, 1

</llo_original>
